<compile_context>
chip_gen: v7x
topology: tpu7x:2x2x1
jax: 0.10.0
libtpu: 0.0.40
codegen_flags: <defaults>
</compile_context>

<pallas_src>
import math

import jax
import jax.numpy as jnp
from jax.experimental import pallas as pl
from jax.experimental.pallas import tpu as pltpu

LANE = 128        # lane width of a vreg
BF16_TILE = 16    # native bf16 sublane tile (2 rows packed per sublane)


def _round_up(n, m):
    return ((n + m - 1) // m) * m


def _twonn_kernel(x_ref, w1_ref, b1_ref, w2_ref, b2_ref, w3_ref, b3_ref, o_ref):
    # Cast x (f32 in HBM/VMEM) to bf16 in-register -- cheap VPU op, avoids a wrapper
    # pad/cast pass over x.
    x = x_ref[...].astype(w1_ref.dtype)
    # Layer 1: x @ W1 + b1, ReLU.  bf16 operands on the MXU, f32 accumulation.
    h1 = jnp.dot(x, w1_ref[...], preferred_element_type=jnp.float32)
    h1 = jnp.maximum(h1 + b1_ref[...], 0.0)
    # Layer 2: h1 @ W2 + b2, ReLU.
    h2 = jnp.dot(h1.astype(w2_ref.dtype), w2_ref[...],
                 preferred_element_type=jnp.float32)
    h2 = jnp.maximum(h2 + b2_ref[...], 0.0)
    # Classifier: h2 @ W3 + b3 (no activation).  Padded class columns stay zero.
    out = jnp.dot(h2.astype(w3_ref.dtype), w3_ref[...],
                  preferred_element_type=jnp.float32)
    o_ref[...] = (out + b3_ref[...]).astype(o_ref.dtype)


def prepare_params(params, compute_dtype=jnp.bfloat16):
    """Zero-pad all feature dims to multiples of 128 lanes and cast weights to bf16.
    Do this once per set of weights (not per forward call)."""
    in_f, hid = params["w1"].shape
    ncls = params["w3"].shape[1]
    in_p = _round_up(in_f, LANE)
    hid_p = _round_up(hid, LANE)
    cls_p = _round_up(ncls, LANE)

    def pad2(a, rows, cols):
        return jnp.pad(a, ((0, rows - a.shape[0]), (0, cols - a.shape[1])))

    return {
        "w1": pad2(params["w1"], in_p, hid_p).astype(compute_dtype),
        "b1": pad2(params["b1"], 1, hid_p).astype(jnp.float32),
        "w2": pad2(params["w2"], hid_p, hid_p).astype(compute_dtype),
        "b2": pad2(params["b2"], 1, hid_p).astype(jnp.float32),
        "w3": pad2(params["w3"], hid_p, cls_p).astype(compute_dtype),
        "b3": pad2(params["b3"], 1, cls_p).astype(jnp.float32),
        "in_features": in_f,
        "num_classes": ncls,
    }


def two_nn_forward_padded(x, prep, *, batch_tile=1024):
    """Core pallas_call.  Returns the padded (b_pad, cls_p) bf16 logits buffer.

    x: (B, 1, resize, resize) float32 (NCHW, like the PyTorch module).
    prep: output of prepare_params().
    """
    B = x.shape[0]
    in_f = prep["in_features"]
    in_p, hid_p = prep["w1"].shape
    cls_p = prep["w3"].shape[1]

    # Flatten() glue stays in plain JAX (a reshape -- no data movement).
    x_flat = x.reshape(B, -1)
    assert x_flat.shape[1] == in_f, "input spatial size inconsistent with w1"

    # Batch tile: 16-row aligned (native bf16 packing), capped at ~B/2 so the grid
    # has >=2 steps whenever possible (both v7x TensorCores get work).
    desired = _round_up(batch_tile, BF16_TILE)
    half = _round_up(pl.cdiv(B, 2), BF16_TILE)
    tb = max(BF16_TILE, min(desired, half))
    b_pad = _round_up(B, tb)

    # Pad only when required (tiny batches / non-128-multiple feature dims).
    if (b_pad != B) or (in_p != in_f):
        x_in = jnp.pad(x_flat, ((0, b_pad - B), (0, in_p - in_f)))
    else:
        x_in = x_flat

    grid = (b_pad // tb,)

    weight_bytes = sum(int(prep[k].size) * prep[k].dtype.itemsize
                       for k in ("w1", "b1", "w2", "b2", "w3", "b3"))
    cost = pl.CostEstimate(
        flops=2 * b_pad * (in_p * hid_p + hid_p * hid_p + hid_p * cls_p),
        transcendentals=0,
        bytes_accessed=(b_pad * in_p * x_in.dtype.itemsize   # x read (f32)
                        + b_pad * cls_p * 2                   # bf16 output write
                        + weight_bytes),
    )

    out = pl.pallas_call(
        _twonn_kernel,
        out_shape=jax.ShapeDtypeStruct((b_pad, cls_p), jnp.bfloat16),
        grid_spec=pltpu.PrefetchScalarGridSpec(
            num_scalar_prefetch=0,
            grid=grid,
            in_specs=[
                pl.BlockSpec((tb, in_p), lambda i: (i, 0)),      # x tile (pipelined)
                pl.BlockSpec((in_p, hid_p), lambda i: (0, 0)),   # W1 (resident)
                pl.BlockSpec((1, hid_p), lambda i: (0, 0)),      # b1
                pl.BlockSpec((hid_p, hid_p), lambda i: (0, 0)),  # W2
                pl.BlockSpec((1, hid_p), lambda i: (0, 0)),      # b2
                pl.BlockSpec((hid_p, cls_p), lambda i: (0, 0)),  # W3
                pl.BlockSpec((1, cls_p), lambda i: (0, 0)),      # b3
            ],
            out_specs=pl.BlockSpec((tb, cls_p), lambda i: (i, 0)),
        ),
        compiler_params=pltpu.CompilerParams(
            dimension_semantics=("parallel",),   # shard batch tiles across TCs (v7x)
        ),
        cost_estimate=cost,
    )(x_in, prep["w1"], prep["b1"], prep["w2"], prep["b2"], prep["w3"], prep["b3"])
    return out


def two_nn_forward(x, prep, *, batch_tile=1024):
    """Convenience wrapper returning (B, num_classes) bf16 logits.
    In a real pipeline, slice/mask inside the downstream consumer (loss / argmax)
    under the same jit so this slice fuses instead of re-reading HBM."""
    out = two_nn_forward_padded(x, prep, batch_tile=batch_tile)
    return out[: x.shape[0], : prep["num_classes"]]


def init_params(key, resize, hidden_size, num_classes):
    """Deterministic init mimicking torch.nn.Linear default (uniform +/- 1/sqrt(fan_in)).
    Weights stored pre-transposed as (in_features, out_features), float32."""
    in_features = resize ** 2
    k1, k2, k3, k4, k5, k6 = jax.random.split(key, 6)

    def linear(kw, kb, fan_in, fan_out):
        bound = 1.0 / math.sqrt(fan_in)
        w = jax.random.uniform(kw, (fan_in, fan_out), jnp.float32, -bound, bound)
        b = jax.random.uniform(kb, (1, fan_out), jnp.float32, -bound, bound)
        return w, b

    w1, b1 = linear(k1, k2, in_features, hidden_size)
    w2, b2 = linear(k3, k4, hidden_size, hidden_size)
    w3, b3 = linear(k5, k6, hidden_size, num_classes)
    return {"w1": w1, "b1": b1, "w2": w2, "b2": b2, "w3": w3, "b3": b3}


def two_nn_reference(x, params):
    """Pure-JAX f32 reference of the PyTorch forward."""
    B = x.shape[0]
    h = x.reshape(B, -1).astype(jnp.float32)
    h = jnp.maximum(h @ params["w1"] + params["b1"], 0.0)
    h = jnp.maximum(h @ params["w2"] + params["b2"], 0.0)
    return h @ params["w3"] + params["b3"]


if __name__ == "__main__":
    resize = 16          # in_features = 256 (already a multiple of 128 -> no feature pad)
    hidden_size = 32
    num_classes = 10
    batch = 2

    key = jax.random.PRNGKey(0)
    kx, kp = jax.random.split(key)

    # NCHW input, single channel, matching in_features = resize**2 after Flatten.
    x = jax.random.normal(kx, (batch, 1, resize, resize), dtype=jnp.float32)
    params = init_params(kp, resize, hidden_size, num_classes)
    prep = prepare_params(params)

    out = two_nn_forward(x, prep)
    out = jax.block_until_ready(out)

    ref = two_nn_reference(x, params)
    assert out.shape == (batch, num_classes)
    # bf16 weights/activations on the MXU (f32 accumulation) + bf16 output store
    # -> loosened tolerance vs. the pure-f32 reference.
    out_f32 = out.astype(jnp.float32)
    max_diff = float(jnp.max(jnp.abs(out_f32 - ref)))
    assert jnp.allclose(out_f32, ref, atol=5e-2, rtol=5e-2), (
        f"mismatch vs reference: max abs diff {max_diff}")

    print("KERNEL_OK")
</pallas_src>

<mosaic_0001>
module attributes {stable_mosaic.version = 11 : i64} {
  func.func @_twonn_kernel(%arg0: i32, %arg1: memref<16x256xf32, #tpu.memory_space<vmem>>, %arg2: memref<256x128xbf16, #tpu.memory_space<vmem>>, %arg3: memref<1x128xf32, #tpu.memory_space<vmem>>, %arg4: memref<128x128xbf16, #tpu.memory_space<vmem>>, %arg5: memref<1x128xf32, #tpu.memory_space<vmem>>, %arg6: memref<128x128xbf16, #tpu.memory_space<vmem>>, %arg7: memref<1x128xf32, #tpu.memory_space<vmem>>, %arg8: memref<16x128xbf16, #tpu.memory_space<vmem>>) attributes {dimension_semantics = [#tpu.dimension_semantics<parallel>], iteration_bounds = array<i64: 1>, scalar_prefetch = 0 : i64, scratch_operands = 0 : i64, tpu.core_type = #tpu.core_type<tc>, window_params = [{transform_indices = @transform_0, window_bounds = array<i64: 16, 256>}, {pipeline_mode = #tpu.pipeline_mode<synchronous>, transform_indices = @transform_1, window_bounds = array<i64: 256, 128>}, {pipeline_mode = #tpu.pipeline_mode<synchronous>, transform_indices = @transform_2, window_bounds = array<i64: 1, 128>}, {pipeline_mode = #tpu.pipeline_mode<synchronous>, transform_indices = @transform_3, window_bounds = array<i64: 128, 128>}, {pipeline_mode = #tpu.pipeline_mode<synchronous>, transform_indices = @transform_4, window_bounds = array<i64: 1, 128>}, {pipeline_mode = #tpu.pipeline_mode<synchronous>, transform_indices = @transform_5, window_bounds = array<i64: 128, 128>}, {pipeline_mode = #tpu.pipeline_mode<synchronous>, transform_indices = @transform_6, window_bounds = array<i64: 1, 128>}, {transform_indices = @transform_7, window_bounds = array<i64: 16, 128>}]} {
    %c0 = arith.constant 0 : index
    %c0_0 = arith.constant 0 : index
    %0 = vector.load %arg1[%c0, %c0_0] : memref<16x256xf32, #tpu.memory_space<vmem>>, vector<16x256xf32>
    %1 = arith.truncf %0 : vector<16x256xf32> to vector<16x256xbf16>
    %c0_1 = arith.constant 0 : index
    %c0_2 = arith.constant 0 : index
    %2 = vector.load %arg2[%c0_1, %c0_2] : memref<256x128xbf16, #tpu.memory_space<vmem>>, vector<256x128xbf16>
    %cst = arith.constant dense<0.000000e+00> : vector<16x128xf32>
    %3 = tpu.matmul %1, %2, %cst {dimension_numbers = #tpu.dot_dimension_numbers<[1], [0], [0], [1], [0, 0, 1, 1], [], []>} : vector<16x256xbf16>, vector<256x128xbf16>, vector<16x128xf32> -> vector<16x128xf32>
    %c0_3 = arith.constant 0 : index
    %c0_4 = arith.constant 0 : index
    %4 = vector.load %arg3[%c0_3, %c0_4] : memref<1x128xf32, #tpu.memory_space<vmem>>, vector<1x128xf32>
    %5 = vector.broadcast %4 : vector<1x128xf32> to vector<16x128xf32>
    %6 = arith.addf %3, %5 : vector<16x128xf32>
    %cst_5 = arith.constant 0.000000e+00 : f32
    %7 = vector.broadcast %cst_5 : f32 to vector<16x128xf32>
    %8 = arith.maximumf %6, %7 : vector<16x128xf32>
    %9 = arith.truncf %8 : vector<16x128xf32> to vector<16x128xbf16>
    %c0_6 = arith.constant 0 : index
    %c0_7 = arith.constant 0 : index
    %10 = vector.load %arg4[%c0_6, %c0_7] : memref<128x128xbf16, #tpu.memory_space<vmem>>, vector<128x128xbf16>
    %cst_8 = arith.constant dense<0.000000e+00> : vector<16x128xf32>
    %11 = tpu.matmul %9, %10, %cst_8 {dimension_numbers = #tpu.dot_dimension_numbers<[1], [0], [0], [1], [0, 0, 1, 1], [], []>} : vector<16x128xbf16>, vector<128x128xbf16>, vector<16x128xf32> -> vector<16x128xf32>
    %c0_9 = arith.constant 0 : index
    %c0_10 = arith.constant 0 : index
    %12 = vector.load %arg5[%c0_9, %c0_10] : memref<1x128xf32, #tpu.memory_space<vmem>>, vector<1x128xf32>
    %13 = vector.broadcast %12 : vector<1x128xf32> to vector<16x128xf32>
    %14 = arith.addf %11, %13 : vector<16x128xf32>
    %cst_11 = arith.constant 0.000000e+00 : f32
    %15 = vector.broadcast %cst_11 : f32 to vector<16x128xf32>
    %16 = arith.maximumf %14, %15 : vector<16x128xf32>
    %17 = arith.truncf %16 : vector<16x128xf32> to vector<16x128xbf16>
    %c0_12 = arith.constant 0 : index
    %c0_13 = arith.constant 0 : index
    %18 = vector.load %arg6[%c0_12, %c0_13] : memref<128x128xbf16, #tpu.memory_space<vmem>>, vector<128x128xbf16>
    %cst_14 = arith.constant dense<0.000000e+00> : vector<16x128xf32>
    %19 = tpu.matmul %17, %18, %cst_14 {dimension_numbers = #tpu.dot_dimension_numbers<[1], [0], [0], [1], [0, 0, 1, 1], [], []>} : vector<16x128xbf16>, vector<128x128xbf16>, vector<16x128xf32> -> vector<16x128xf32>
    %c0_15 = arith.constant 0 : index
    %c0_16 = arith.constant 0 : index
    %20 = vector.load %arg7[%c0_15, %c0_16] : memref<1x128xf32, #tpu.memory_space<vmem>>, vector<1x128xf32>
    %21 = vector.broadcast %20 : vector<1x128xf32> to vector<16x128xf32>
    %22 = arith.addf %19, %21 : vector<16x128xf32>
    %23 = arith.truncf %22 : vector<16x128xf32> to vector<16x128xbf16>
    %c0_17 = arith.constant 0 : index
    %c0_18 = arith.constant 0 : index
    %24 = vector.load %arg8[%c0_17, %c0_18] : memref<16x128xbf16, #tpu.memory_space<vmem>>, vector<16x128xbf16>
    tpu.vector_store %arg8[%c0_17, %c0_18], %23 {strides = array<i32>} : memref<16x128xbf16, #tpu.memory_space<vmem>>, vector<16x128xbf16>,
    return
  }
  func.func @transform_0(%arg0: i32) -> (i32, i32) {
    %c0_i32 = arith.constant 0 : i32
    %c0_i32_0 = arith.constant 0 : i32
    return %arg0, %c0_i32 : i32, i32
  }
  func.func @transform_1(%arg0: i32) -> (i32, i32) {
    %c0_i32 = arith.constant 0 : i32
    %c0_i32_0 = arith.constant 0 : i32
    %c0_i32_1 = arith.constant 0 : i32
    return %c0_i32, %c0_i32_0 : i32, i32
  }
  func.func @transform_2(%arg0: i32) -> (i32, i32) {
    %c0_i32 = arith.constant 0 : i32
    %c0_i32_0 = arith.constant 0 : i32
    %c0_i32_1 = arith.constant 0 : i32
    return %c0_i32, %c0_i32_0 : i32, i32
  }
  func.func @transform_3(%arg0: i32) -> (i32, i32) {
    %c0_i32 = arith.constant 0 : i32
    %c0_i32_0 = arith.constant 0 : i32
    %c0_i32_1 = arith.constant 0 : i32
    return %c0_i32, %c0_i32_0 : i32, i32
  }
  func.func @transform_4(%arg0: i32) -> (i32, i32) {
    %c0_i32 = arith.constant 0 : i32
    %c0_i32_0 = arith.constant 0 : i32
    %c0_i32_1 = arith.constant 0 : i32
    return %c0_i32, %c0_i32_0 : i32, i32
  }
  func.func @transform_5(%arg0: i32) -> (i32, i32) {
    %c0_i32 = arith.constant 0 : i32
    %c0_i32_0 = arith.constant 0 : i32
    %c0_i32_1 = arith.constant 0 : i32
    return %c0_i32, %c0_i32_0 : i32, i32
  }
  func.func @transform_6(%arg0: i32) -> (i32, i32) {
    %c0_i32 = arith.constant 0 : i32
    %c0_i32_0 = arith.constant 0 : i32
    %c0_i32_1 = arith.constant 0 : i32
    return %c0_i32, %c0_i32_0 : i32, i32
  }
  func.func @transform_7(%arg0: i32) -> (i32, i32) {
    %c0_i32 = arith.constant 0 : i32
    %c0_i32_0 = arith.constant 0 : i32
    return %arg0, %c0_i32 : i32, i32
  }
}

</mosaic_0001>

<llo_original>
// kernel: tpu_custom_call.1
$region0: #{tpu_custom_call.1}
  #allocation0 [shape = 'u32[]', space=smem, size = 0x4, offset = 0x4, fixed_abs, tag = 'smem constant byte address 0x4 - core index']
  #allocation1 [shape = 'u32[144,128]{1,0:T(1,128)}', space=vmem, size = 0x12000, scoped, tag = 'internal scratch']
  %s0 = inlined_call_operand.hbm [shape: f32[16,256], index: 0, kind: input, shape index: {}]
  %s1 = inlined_call_operand.hbm [shape: bf16[256,128], index: 1, kind: input, shape index: {}]
  %s2 = inlined_call_operand.vmem [shape: f32[1,128], index: 2, kind: input, shape index: {}]
  %s3 = inlined_call_operand.hbm [shape: bf16[128,128], index: 3, kind: input, shape index: {}]
  %s4 = inlined_call_operand.vmem [shape: f32[1,128], index: 4, kind: input, shape index: {}]
  %s5 = inlined_call_operand.hbm [shape: bf16[128,128], index: 5, kind: input, shape index: {}]
  %s6 = inlined_call_operand.vmem [shape: f32[1,128], index: 6, kind: input, shape index: {}]
  %s7 = inlined_call_operand.hbm [shape: bf16[16,128], index: 7, kind: output, shape index: {}]
  %s8 = sld [smem:[#allocation0]]
  $region54: #{tpu_custom_call.1} parent=0
    _
  %s10 = ssub.s32 1, %s8
  %s11 = scalar_select 0, %s10, %s8
  $region1: #{tpu_custom_call.1} parent=0
    #allocation2 [shape = 'u8[16384]{0}', space=vmem, size = 0x4000, scoped, tag = 'input window, operand 0, single buffered']
    #allocation3 [shape = 's32[1]{0}', space=sflag, size = 0x4, scoped, tag = 'scoped memory for tpu_custom_call.1']
    #allocation4 [shape = 's32[1]{0}', space=sflag, size = 0x4, scoped, tag = 'scoped memory for tpu_custom_call.1']
    #allocation5 [shape = 'u8[65536]{0}', space=vmem, size = 0x10000, scoped, tag = 'input window, operand 1, single buffered']
    #allocation6 [shape = 's32[1]{0}', space=sflag, size = 0x4, scoped, tag = 'scoped memory for tpu_custom_call.1']
    #allocation7 [shape = 'u8[32768]{0}', space=vmem, size = 0x8000, scoped, tag = 'input window, operand 3, single buffered']
    #allocation8 [shape = 'u8[32768]{0}', space=vmem, size = 0x8000, scoped, tag = 'input window, operand 5, single buffered']
    #allocation9 [shape = 's32[1]{0}', space=sflag, size = 0x4, scoped, tag = 'scoped memory for tpu_custom_call.1']
    #allocation10 [shape = 'u8[4096]{0}', space=vmem, size = 0x1000, scoped, tag = 'output window, operand 0, single buffered']
    %12 = vsyncpa [#allocation3], 0
    %13 = vsyncpa [#allocation6], 0
    %14 = vsyncpa [#allocation9], 0
    %15 = vsyncpa [#allocation4], 0
    // Predicated region
    $region2: #{tpu_custom_call.1} parent=1 // pred_check
      _
    $region3: #{tpu_custom_call.1} parent=1 // pred_check_branch
      %17 = sbr.rel (0) target = $region5
    $region4: #{tpu_custom_call.1} parent=1 // pred_region
      %s19 = ssub.s32 512, 512
      %20 = vsyncadd [#allocation3], %s19
      %s21 = sshll.u32 [#allocation2], 4
      %s22 = int_to_ptr.vmem [resolvable:$true] %s21
      %27 = dma.hbm_to_vmem [thread:$0]  %s0, 512, %s22, [#allocation3], 256, 256, 16
    $region5: #{tpu_custom_call.1} parent=1 // pred_fallthru
      _
    // Predicated region
    $region6: #{tpu_custom_call.1} parent=1 // pred_check
      _
    $region7: #{tpu_custom_call.1} parent=1 // pred_check_branch
      %29 = sbr.rel (0) target = $region9
    $region8: #{tpu_custom_call.1} parent=1 // pred_region
      %s31 = ssub.s32 2048, 2048
      %32 = vsyncadd [#allocation6], %s31
      %s33 = sshll.u32 [#allocation5], 4
      %s34 = int_to_ptr.vmem [resolvable:$true] %s33
      %39 = dma.hbm_to_vmem [thread:$0]  %s1, 2048, %s34, [#allocation6], 64, 64, 4
    $region9: #{tpu_custom_call.1} parent=1 // pred_fallthru
      _
    // Predicated region
    $region10: #{tpu_custom_call.1} parent=1 // pred_check
      _
    $region11: #{tpu_custom_call.1} parent=1 // pred_check_branch
      %41 = sbr.rel (0) target = $region13
    $region12: #{tpu_custom_call.1} parent=1 // pred_region
      _
    $region13: #{tpu_custom_call.1} parent=1 // pred_fallthru
      _
    // Predicated region
    $region14: #{tpu_custom_call.1} parent=1 // pred_check
      _
    $region15: #{tpu_custom_call.1} parent=1 // pred_check_branch
      %43 = sbr.rel (0) target = $region17
    $region16: #{tpu_custom_call.1} parent=1 // pred_region
      %s45 = ssub.s32 1024, 1024
      %46 = vsyncadd [#allocation6], %s45
      %s47 = sshll.u32 [#allocation7], 4
      %s48 = int_to_ptr.vmem [resolvable:$true] %s47
      %53 = dma.hbm_to_vmem [thread:$0]  %s3, 1024, %s48, [#allocation6], 64, 64, 4
    $region17: #{tpu_custom_call.1} parent=1 // pred_fallthru
      _
    // Predicated region
    $region18: #{tpu_custom_call.1} parent=1 // pred_check
      _
    $region19: #{tpu_custom_call.1} parent=1 // pred_check_branch
      %55 = sbr.rel (0) target = $region21
    $region20: #{tpu_custom_call.1} parent=1 // pred_region
      _
    $region21: #{tpu_custom_call.1} parent=1 // pred_fallthru
      _
    // Predicated region
    $region22: #{tpu_custom_call.1} parent=1 // pred_check
      _
    $region23: #{tpu_custom_call.1} parent=1 // pred_check_branch
      %57 = sbr.rel (0) target = $region25
    $region24: #{tpu_custom_call.1} parent=1 // pred_region
      %s59 = ssub.s32 1024, 1024
      %60 = vsyncadd [#allocation9], %s59
      %s61 = sshll.u32 [#allocation8], 4
      %s62 = int_to_ptr.vmem [resolvable:$true] %s61
      %67 = dma.hbm_to_vmem [thread:$0]  %s5, 1024, %s62, [#allocation9], 64, 64, 4
    $region25: #{tpu_custom_call.1} parent=1 // pred_fallthru
      _
    // Predicated region
    $region26: #{tpu_custom_call.1} parent=1 // pred_check
      _
    $region27: #{tpu_custom_call.1} parent=1 // pred_check_branch
      %69 = sbr.rel (0) target = $region29
    $region28: #{tpu_custom_call.1} parent=1 // pred_region
      _
    $region29: #{tpu_custom_call.1} parent=1 // pred_fallthru
      _
    // Predicated region
    $region30: #{tpu_custom_call.1} parent=1 // pred_check
      _
    $region31: #{tpu_custom_call.1} parent=1 // pred_check_branch
      %71 = sbr.rel (0) target = $region33
    $region32: #{tpu_custom_call.1} parent=1 // pred_region
      %72 = dma.done [#allocation3], 512
    $region33: #{tpu_custom_call.1} parent=1 // pred_fallthru
      _
    // Predicated region
    $region34: #{tpu_custom_call.1} parent=1 // pred_check
      _
    $region35: #{tpu_custom_call.1} parent=1 // pred_check_branch
      %74 = sbr.rel (0) target = $region37
    $region36: #{tpu_custom_call.1} parent=1 // pred_region
      %75 = dma.done [#allocation6], 2048
    $region37: #{tpu_custom_call.1} parent=1 // pred_fallthru
      _
    // Predicated region
    $region38: #{tpu_custom_call.1} parent=1 // pred_check
      _
    $region39: #{tpu_custom_call.1} parent=1 // pred_check_branch
      %77 = sbr.rel (0) target = $region41
    $region40: #{tpu_custom_call.1} parent=1 // pred_region
      %78 = dma.done [#allocation6], 1024
    $region41: #{tpu_custom_call.1} parent=1 // pred_fallthru
      _
    // Predicated region
    $region42: #{tpu_custom_call.1} parent=1 // pred_check
      _
    $region43: #{tpu_custom_call.1} parent=1 // pred_check_branch
      %80 = sbr.rel (0) target = $region45
    $region44: #{tpu_custom_call.1} parent=1 // pred_region
      %81 = dma.done [#allocation9], 1024
    $region45: #{tpu_custom_call.1} parent=1 // pred_fallthru
      _
    %v83 = vld [vmem:[#allocation2] sm:$0xff]
    %v84 = vld [vmem:[#allocation2 + $0x8] sm:$0xff]
    %v85 = vld [vmem:[#allocation2 + $0x10] sm:$0xff]
    %v86 = vld [vmem:[#allocation2 + $0x18] sm:$0xff]
    %v87 = vpack.c.bf16 %v85, %v83
    %v88 = vpack.c.bf16 %v86, %v84
    %v89 = vld [vmem:[#allocation5] sm:$0xf]
    %v90 = vld [vmem:[#allocation5 + $0x4] sm:$0xf]
    %v91 = vld [vmem:[#allocation5 + $0x8] sm:$0xf]
    %v92 = vld [vmem:[#allocation5 + $0xc] sm:$0xf]
    %v93 = vld [vmem:[#allocation5 + $0x10] sm:$0xf]
    %v94 = vld [vmem:[#allocation5 + $0x14] sm:$0xf]
    %v95 = vld [vmem:[#allocation5 + $0x18] sm:$0xf]
    %v96 = vld [vmem:[#allocation5 + $0x1c] sm:$0xf]
    %v97 = vld [vmem:[#allocation5 + $0x20] sm:$0xf]
    %v98 = vld [vmem:[#allocation5 + $0x24] sm:$0xf]
    %v99 = vld [vmem:[#allocation5 + $0x28] sm:$0xf]
    %v100 = vld [vmem:[#allocation5 + $0x2c] sm:$0xf]
    %v101 = vld [vmem:[#allocation5 + $0x30] sm:$0xf]
    %v102 = vld [vmem:[#allocation5 + $0x34] sm:$0xf]
    %v103 = vld [vmem:[#allocation5 + $0x38] sm:$0xf]
    %v104 = vld [vmem:[#allocation5 + $0x3c] sm:$0xf]
    %v105 = vld [vmem:[#allocation5 + $0x40] sm:$0xf]
    %v106 = vld [vmem:[#allocation5 + $0x44] sm:$0xf]
    %v107 = vld [vmem:[#allocation5 + $0x48] sm:$0xf]
    %v108 = vld [vmem:[#allocation5 + $0x4c] sm:$0xf]
    %v109 = vld [vmem:[#allocation5 + $0x50] sm:$0xf]
    %v110 = vld [vmem:[#allocation5 + $0x54] sm:$0xf]
    %v111 = vld [vmem:[#allocation5 + $0x58] sm:$0xf]
    %v112 = vld [vmem:[#allocation5 + $0x5c] sm:$0xf]
    %v113 = vld [vmem:[#allocation5 + $0x60] sm:$0xf]
    %v114 = vld [vmem:[#allocation5 + $0x64] sm:$0xf]
    %v115 = vld [vmem:[#allocation5 + $0x68] sm:$0xf]
    %v116 = vld [vmem:[#allocation5 + $0x6c] sm:$0xf]
    %v117 = vld [vmem:[#allocation5 + $0x70] sm:$0xf]
    %v118 = vld [vmem:[#allocation5 + $0x74] sm:$0xf]
    %v119 = vld [vmem:[#allocation5 + $0x78] sm:$0xf]
    %v120 = vld [vmem:[#allocation5 + $0x7c] sm:$0xf]
    %v121 = vld [vmem:[%s2] sm:$0x1]
    %v123 = vlaneseq
    %v124 = vshrl.u32 %v123, 7
    %v125 = vsub.s32 0, %v124
    %v126 = vrot.slane %v121, %v125
    %v160 = vunpack.c.l.b16 %v89
    %v161 = vunpack.c.l.b16 %v90
    %v162 = vunpack.c.l.b16 %v91
    %v163 = vunpack.c.l.b16 %v92
    %v164 = vunpack.c.l.b16 %v93
    %v165 = vunpack.c.l.b16 %v94
    %v166 = vunpack.c.l.b16 %v95
    %v167 = vunpack.c.l.b16 %v96
    %v168 = vunpack.c.l.b16 %v97
    %v169 = vunpack.c.l.b16 %v98
    %v170 = vunpack.c.l.b16 %v99
    %v171 = vunpack.c.l.b16 %v100
    %v172 = vunpack.c.l.b16 %v101
    %v173 = vunpack.c.l.b16 %v102
    %v174 = vunpack.c.l.b16 %v103
    %v175 = vunpack.c.l.b16 %v104
    %v176 = vunpack.c.l.b16 %v105
    %v177 = vunpack.c.l.b16 %v106
    %v178 = vunpack.c.l.b16 %v107
    %v179 = vunpack.c.l.b16 %v108
    %v180 = vunpack.c.l.b16 %v109
    %v181 = vunpack.c.l.b16 %v110
    %v182 = vunpack.c.l.b16 %v111
    %v183 = vunpack.c.l.b16 %v112
    %v184 = vunpack.c.l.b16 %v113
    %v185 = vunpack.c.l.b16 %v114
    %v186 = vunpack.c.l.b16 %v115
    %v187 = vunpack.c.l.b16 %v116
    %v188 = vunpack.c.l.b16 %v117
    %v189 = vunpack.c.l.b16 %v118
    %v190 = vunpack.c.l.b16 %v119
    %v191 = vunpack.c.l.b16 %v120
    %v192 = vpack.c.b16 %v161, %v160
    %v193 = vpack.c.b16 %v163, %v162
    %v194 = vpack.c.b16 %v165, %v164
    %v195 = vpack.c.b16 %v167, %v166
    %v196 = vpack.c.b16 %v169, %v168
    %v197 = vpack.c.b16 %v171, %v170
    %v198 = vpack.c.b16 %v173, %v172
    %v199 = vpack.c.b16 %v175, %v174
    %v200 = vpack.c.b16 %v177, %v176
    %v201 = vpack.c.b16 %v179, %v178
    %v202 = vpack.c.b16 %v181, %v180
    %v203 = vpack.c.b16 %v183, %v182
    %v204 = vpack.c.b16 %v185, %v184
    %v205 = vpack.c.b16 %v187, %v186
    %v206 = vpack.c.b16 %v189, %v188
    %v207 = vpack.c.b16 %v191, %v190
    %224 = vmatprep.subr.bf16.mxu0 0
    %225 = vmatpush1.bf16.msra.mxu0 %v192
    %226 = vmatprep.subr.bf16.mxu0 0
    %227 = vmatpush1.bf16.msra.mxu0 %v193
    %228 = vmatprep.subr.bf16.mxu0 0
    %229 = vmatpush1.bf16.msra.mxu0 %v194
    %230 = vmatprep.subr.bf16.mxu0 0
    %231 = vmatpush1.bf16.msra.mxu0 %v195
    %232 = vmatprep.subr.bf16.mxu0 0
    %233 = vmatpush1.bf16.msra.mxu0 %v196
    %234 = vmatprep.subr.bf16.mxu0 0
    %235 = vmatpush1.bf16.msra.mxu0 %v197
    %236 = vmatprep.subr.bf16.mxu0 0
    %237 = vmatpush1.bf16.msra.mxu0 %v198
    %238 = vmatprep.subr.bf16.mxu0 0
    %239 = vmatpush1.bf16.msra.mxu0 %v199
    %240 = vmatprep.subr.bf16.mxu0 0
    %241 = vmatpush1.bf16.msra.mxu0 %v200
    %242 = vmatprep.subr.bf16.mxu0 0
    %243 = vmatpush1.bf16.msra.mxu0 %v201
    %244 = vmatprep.subr.bf16.mxu0 0
    %245 = vmatpush1.bf16.msra.mxu0 %v202
    %246 = vmatprep.subr.bf16.mxu0 0
    %247 = vmatpush1.bf16.msra.mxu0 %v203
    %248 = vmatprep.subr.bf16.mxu0 0
    %249 = vmatpush1.bf16.msra.mxu0 %v204
    %250 = vmatprep.subr.bf16.mxu0 0
    %251 = vmatpush1.bf16.msra.mxu0 %v205
    %252 = vmatprep.subr.bf16.mxu0 0
    %253 = vmatpush1.bf16.msra.mxu0 %v206
    %254 = vmatprep.subr.bf16.mxu0 0
    %255 = vmatpush1.bf16.msra.mxu0 %v207
    %256 = vmatprep.mubr.bf16.mxu0 %v88
    %257 = vmatmul.mubr.bf16.gmra.mrb[0].mxu0 %v87
    %v258 = vpop.f32.mrb[0].mxu0
    %v259 = vadd.f32 %v126, %v258
    %v260 = vpop.f32.mrb[0].mxu0
    %v261 = vpop.f32.mrb[0].mxu0
    %v262 = vadd.f32 %v126, %v261
    %v263 = vpop.f32.mrb[0].mxu0
    %264 = vdwg.mxu0
    %v265 = vmax.f32 %v259, 0.0
    %v266 = vmax.f32 %v262, 0.0
    %v267 = vpack.c.bf16 %v266, %v265
    %v268 = vld [vmem:[#allocation7] sm:$0xf]
    %v269 = vld [vmem:[#allocation7 + $0x4] sm:$0xf]
    %v270 = vld [vmem:[#allocation7 + $0x8] sm:$0xf]
    %v271 = vld [vmem:[#allocation7 + $0xc] sm:$0xf]
    %v272 = vld [vmem:[#allocation7 + $0x10] sm:$0xf]
    %v273 = vld [vmem:[#allocation7 + $0x14] sm:$0xf]
    %v274 = vld [vmem:[#allocation7 + $0x18] sm:$0xf]
    %v275 = vld [vmem:[#allocation7 + $0x1c] sm:$0xf]
    %v276 = vld [vmem:[#allocation7 + $0x20] sm:$0xf]
    %v277 = vld [vmem:[#allocation7 + $0x24] sm:$0xf]
    %v278 = vld [vmem:[#allocation7 + $0x28] sm:$0xf]
    %v279 = vld [vmem:[#allocation7 + $0x2c] sm:$0xf]
    %v280 = vld [vmem:[#allocation7 + $0x30] sm:$0xf]
    %v281 = vld [vmem:[#allocation7 + $0x34] sm:$0xf]
    %v282 = vld [vmem:[#allocation7 + $0x38] sm:$0xf]
    %v283 = vld [vmem:[#allocation7 + $0x3c] sm:$0xf]
    %v284 = vld [vmem:[%s4] sm:$0x1]
    %v286 = vlaneseq
    %v287 = vshrl.u32 %v286, 7
    %v288 = vsub.s32 0, %v287
    %v289 = vrot.slane %v284, %v288
    %v307 = vunpack.c.l.b16 %v268
    %v308 = vunpack.c.l.b16 %v269
    %v309 = vunpack.c.l.b16 %v270
    %v310 = vunpack.c.l.b16 %v271
    %v311 = vunpack.c.l.b16 %v272
    %v312 = vunpack.c.l.b16 %v273
    %v313 = vunpack.c.l.b16 %v274
    %v314 = vunpack.c.l.b16 %v275
    %v315 = vunpack.c.l.b16 %v276
    %v316 = vunpack.c.l.b16 %v277
    %v317 = vunpack.c.l.b16 %v278
    %v318 = vunpack.c.l.b16 %v279
    %v319 = vunpack.c.l.b16 %v280
    %v320 = vunpack.c.l.b16 %v281
    %v321 = vunpack.c.l.b16 %v282
    %v322 = vunpack.c.l.b16 %v283
    %v323 = vpack.c.b16 %v308, %v307
    %v324 = vpack.c.b16 %v310, %v309
    %v325 = vpack.c.b16 %v312, %v311
    %v326 = vpack.c.b16 %v314, %v313
    %v327 = vpack.c.b16 %v316, %v315
    %v328 = vpack.c.b16 %v318, %v317
    %v329 = vpack.c.b16 %v320, %v319
    %v330 = vpack.c.b16 %v322, %v321
    %339 = vmatprep.subr.bf16.mxu0 0
    %340 = vmatpush1.bf16.msra.mxu0 %v323
    %341 = vmatprep.subr.bf16.mxu0 0
    %342 = vmatpush1.bf16.msra.mxu0 %v324
    %343 = vmatprep.subr.bf16.mxu0 0
    %344 = vmatpush1.bf16.msra.mxu0 %v325
    %345 = vmatprep.subr.bf16.mxu0 0
    %346 = vmatpush1.bf16.msra.mxu0 %v326
    %347 = vmatprep.subr.bf16.mxu0 0
    %348 = vmatpush1.bf16.msra.mxu0 %v327
    %349 = vmatprep.subr.bf16.mxu0 0
    %350 = vmatpush1.bf16.msra.mxu0 %v328
    %351 = vmatprep.subr.bf16.mxu0 0
    %352 = vmatpush1.bf16.msra.mxu0 %v329
    %353 = vmatprep.subr.bf16.mxu0 0
    %354 = vmatpush1.bf16.msra.mxu0 %v330
    %355 = vmatprep.subr.bf16.mxu0 0
    %356 = vmatpush1.bf16.msra.mxu0 0
    %357 = vmatprep.subr.bf16.mxu0 0
    %358 = vmatpush1.bf16.msra.mxu0 0
    %359 = vmatprep.subr.bf16.mxu0 0
    %360 = vmatpush1.bf16.msra.mxu0 0
    %361 = vmatprep.subr.bf16.mxu0 0
    %362 = vmatpush1.bf16.msra.mxu0 0
    %363 = vmatprep.subr.bf16.mxu0 0
    %364 = vmatpush1.bf16.msra.mxu0 0
    %365 = vmatprep.subr.bf16.mxu0 0
    %366 = vmatpush1.bf16.msra.mxu0 0
    %367 = vmatprep.subr.bf16.mxu0 0
    %368 = vmatpush1.bf16.msra.mxu0 0
    %369 = vmatprep.subr.bf16.mxu0 0
    %370 = vmatpush1.bf16.msra.mxu0 0
    %371 = vmatprep.mubr.bf16.mxu0 0
    %372 = vmatmul.mubr.bf16.gmra.mrb[0].mxu0 %v267
    %v373 = vpop.f32.mrb[0].mxu0
    %v374 = vadd.f32 %v289, %v373
    %v375 = vpop.f32.mrb[0].mxu0
    %v376 = vpop.f32.mrb[0].mxu0
    %v377 = vadd.f32 %v289, %v376
    %v378 = vpop.f32.mrb[0].mxu0
    %379 = vdwg.mxu0
    %v380 = vmax.f32 %v374, 0.0
    %v381 = vmax.f32 %v377, 0.0
    %v382 = vpack.c.bf16 %v381, %v380
    %v383 = vld [vmem:[#allocation8] sm:$0xf]
    %v384 = vld [vmem:[#allocation8 + $0x4] sm:$0xf]
    %v385 = vld [vmem:[#allocation8 + $0x8] sm:$0xf]
    %v386 = vld [vmem:[#allocation8 + $0xc] sm:$0xf]
    %v387 = vld [vmem:[#allocation8 + $0x10] sm:$0xf]
    %v388 = vld [vmem:[#allocation8 + $0x14] sm:$0xf]
    %v389 = vld [vmem:[#allocation8 + $0x18] sm:$0xf]
    %v390 = vld [vmem:[#allocation8 + $0x1c] sm:$0xf]
    %v391 = vld [vmem:[#allocation8 + $0x20] sm:$0xf]
    %v392 = vld [vmem:[#allocation8 + $0x24] sm:$0xf]
    %v393 = vld [vmem:[#allocation8 + $0x28] sm:$0xf]
    %v394 = vld [vmem:[#allocation8 + $0x2c] sm:$0xf]
    %v395 = vld [vmem:[#allocation8 + $0x30] sm:$0xf]
    %v396 = vld [vmem:[#allocation8 + $0x34] sm:$0xf]
    %v397 = vld [vmem:[#allocation8 + $0x38] sm:$0xf]
    %v398 = vld [vmem:[#allocation8 + $0x3c] sm:$0xf]
    %v399 = vld [vmem:[%s6] sm:$0x1]
    %v401 = vlaneseq
    %v402 = vshrl.u32 %v401, 7
    %v403 = vsub.s32 0, %v402
    %v404 = vrot.slane %v399, %v403
    %v422 = vunpack.c.l.b16 %v383
    %v423 = vunpack.c.l.b16 %v384
    %v424 = vunpack.c.l.b16 %v385
    %v425 = vunpack.c.l.b16 %v386
    %v426 = vunpack.c.l.b16 %v387
    %v427 = vunpack.c.l.b16 %v388
    %v428 = vunpack.c.l.b16 %v389
    %v429 = vunpack.c.l.b16 %v390
    %v430 = vunpack.c.l.b16 %v391
    %v431 = vunpack.c.l.b16 %v392
    %v432 = vunpack.c.l.b16 %v393
    %v433 = vunpack.c.l.b16 %v394
    %v434 = vunpack.c.l.b16 %v395
    %v435 = vunpack.c.l.b16 %v396
    %v436 = vunpack.c.l.b16 %v397
    %v437 = vunpack.c.l.b16 %v398
    %v438 = vpack.c.b16 %v423, %v422
    %v439 = vpack.c.b16 %v425, %v424
    %v440 = vpack.c.b16 %v427, %v426
    %v441 = vpack.c.b16 %v429, %v428
    %v442 = vpack.c.b16 %v431, %v430
    %v443 = vpack.c.b16 %v433, %v432
    %v444 = vpack.c.b16 %v435, %v434
    %v445 = vpack.c.b16 %v437, %v436
    %454 = vmatprep.subr.bf16.mxu0 0
    %455 = vmatpush1.bf16.msra.mxu0 %v438
    %456 = vmatprep.subr.bf16.mxu0 0
    %457 = vmatpush1.bf16.msra.mxu0 %v439
    %458 = vmatprep.subr.bf16.mxu0 0
    %459 = vmatpush1.bf16.msra.mxu0 %v440
    %460 = vmatprep.subr.bf16.mxu0 0
    %461 = vmatpush1.bf16.msra.mxu0 %v441
    %462 = vmatprep.subr.bf16.mxu0 0
    %463 = vmatpush1.bf16.msra.mxu0 %v442
    %464 = vmatprep.subr.bf16.mxu0 0
    %465 = vmatpush1.bf16.msra.mxu0 %v443
    %466 = vmatprep.subr.bf16.mxu0 0
    %467 = vmatpush1.bf16.msra.mxu0 %v444
    %468 = vmatprep.subr.bf16.mxu0 0
    %469 = vmatpush1.bf16.msra.mxu0 %v445
    %470 = vmatprep.subr.bf16.mxu0 0
    %471 = vmatpush1.bf16.msra.mxu0 0
    %472 = vmatprep.subr.bf16.mxu0 0
    %473 = vmatpush1.bf16.msra.mxu0 0
    %474 = vmatprep.subr.bf16.mxu0 0
    %475 = vmatpush1.bf16.msra.mxu0 0
    %476 = vmatprep.subr.bf16.mxu0 0
    %477 = vmatpush1.bf16.msra.mxu0 0
    %478 = vmatprep.subr.bf16.mxu0 0
    %479 = vmatpush1.bf16.msra.mxu0 0
    %480 = vmatprep.subr.bf16.mxu0 0
    %481 = vmatpush1.bf16.msra.mxu0 0
    %482 = vmatprep.subr.bf16.mxu0 0
    %483 = vmatpush1.bf16.msra.mxu0 0
    %484 = vmatprep.subr.bf16.mxu0 0
    %485 = vmatpush1.bf16.msra.mxu0 0
    %486 = vmatprep.mubr.bf16.mxu0 0
    %487 = vmatmul.mubr.bf16.gmra.mrb[0].mxu0 %v382
    %v488 = vpop.f32.mrb[0].mxu0
    %v489 = vadd.f32 %v404, %v488
    %v490 = vpop.f32.mrb[0].mxu0
    %v491 = vpop.f32.mrb[0].mxu0
    %v492 = vadd.f32 %v404, %v491
    %v493 = vpop.f32.mrb[0].mxu0
    %494 = vdwg.mxu0
    %v495 = vpack.c.bf16 %v492, %v489
    %v497 = vunpack.c.l.b16 %v495
    %v498 = vunpack.c.h.b16 %v495
    %v499 = vpack.c.b16 %v497, %v497
    %v500 = vpack.c.b16 %v498, %v498
    %503 = vst [vmem:[#allocation10] sm:$0xf] %v499
    %504 = vst [vmem:[#allocation10 + $0x4] sm:$0xf] %v500
    // Predicated region
    $region46: #{tpu_custom_call.1} parent=1 // pred_check
      _
    $region47: #{tpu_custom_call.1} parent=1 // pred_check_branch
      %506 = sbr.rel (0) target = $region49
    $region48: #{tpu_custom_call.1} parent=1 // pred_region
      %s508 = ssub.s32 128, 128
      %509 = vsyncadd [#allocation4], %s508
      %s510 = sshll.u32 [#allocation10], 4
      %s511 = int_to_ptr.vmem [resolvable:$true] %s510
      %516 = dma.vmem_to_hbm [thread:$0]  %s511, 128, %s7, [#allocation4], 64, 64, 4
    $region49: #{tpu_custom_call.1} parent=1 // pred_fallthru
      _
    // Predicated region
    $region50: #{tpu_custom_call.1} parent=1 // pred_check
      _
    $region51: #{tpu_custom_call.1} parent=1 // pred_check_branch
      %518 = sbr.rel (0) target = $region53
    $region52: #{tpu_custom_call.1} parent=1 // pred_region
      %519 = dma.done [#allocation4], 128
    $region53: #{tpu_custom_call.1} parent=1 // pred_fallthru
      _
    %520 = vsyncpa [#allocation3], 1
    %521 = vsyncpa [#allocation6], 1
    %522 = vsyncpa [#allocation9], 1
    %523 = vsyncpa [#allocation4], 1

</llo_original>
